<compile_context>
chip_gen: v5e
topology: v5e:2x2
jax: 0.10.0
libtpu: 0.0.40
codegen_flags: <defaults>
</compile_context>

<pallas_src>
import jax
import jax.numpy as jnp
from jax.experimental import pallas as pl
from jax.experimental.pallas import tpu as pltpu

LANE = 128
ROW_ALIGN = 16      # bf16 packs 2 rows/sublane -> keep batch tiles 16-aligned.
TM_CAP = 4096       # rows per tile; worst-case VMEM ~4.5 MB, far under limits.


def _round_up(x, m):
    return (x + m - 1) // m * m


def _preferred_parallel_tiles():
    """How many 'parallel' grid steps to expose. Only v7x packs 2 TensorCores
    behind one JAX device; v5e/v6e have one, so a single big tile (grid=(1,))
    minimizes padding and per-step overhead there."""
    try:
        kind = jax.devices()[0].device_kind.lower()
    except Exception:
        return 1
    if any(tag in kind for tag in ("v2", "v3", "v4", "v5", "v6")):
        return 1
    return 2 if "7" in kind else 1


def _choose_tiling(B, *, row_align=ROW_ALIGN, tm_cap=TM_CAP, n_tiles=None):
    """Adaptive batch tiling: b_pad ~= round_up(B, 16) rather than rounding B
    up to a fixed tile size, so e.g. B=600 costs 608 rows instead of 1024."""
    if n_tiles is None:
        n_tiles = _preferred_parallel_tiles()
    if B < n_tiles * row_align * 2:
        n_tiles = 1                            # not worth splitting tiny batches
    n_tiles = max(n_tiles, pl.cdiv(B, tm_cap))  # respect the per-tile cap
    tm = _round_up(pl.cdiv(B, n_tiles), row_align)
    return tm, tm * n_tiles, n_tiles


def _mlp_kernel(z_ref, w1_ref, b1_ref, w2_ref, b2_ref, w3_ref, b3_ref, out_ref):
    # Layer 1: Linear (bf16 MXU, f32 accumulate) + bias + ReLU in f32.
    h = jnp.dot(z_ref[...], w1_ref[...], preferred_element_type=jnp.float32)
    h = jnp.maximum(h + b1_ref[...], 0.0)
    # Layer 2: Linear + ReLU.
    h = jnp.dot(h.astype(w2_ref.dtype), w2_ref[...],
                preferred_element_type=jnp.float32)
    h = jnp.maximum(h + b2_ref[...], 0.0)
    # Output layer: Linear (logits), lane-dense (padded to 128 columns).
    o = jnp.dot(h.astype(w3_ref.dtype), w3_ref[...],
                preferred_element_type=jnp.float32)
    out_ref[...] = (o + b3_ref[...]).astype(out_ref.dtype)   # bf16 store


def init_params(key, input_size, hidden1, hidden2, num_classes):
    """Deterministic synthetic init mirroring torch.nn.Linear (stored
    transposed as (in, out) so the kernel computes x @ W)."""
    k1, k2, k3, k4, k5, k6 = jax.random.split(key, 6)

    def lin(kw, kb, fan_in, fan_out):
        bound = 1.0 / jnp.sqrt(fan_in)
        w = jax.random.uniform(kw, (fan_in, fan_out), jnp.float32, -bound, bound)
        b = jax.random.uniform(kb, (1, fan_out), jnp.float32, -bound, bound)
        return w, b

    w1, b1 = lin(k1, k2, input_size, hidden1)
    w2, b2 = lin(k3, k4, hidden1, hidden2)
    w3, b3 = lin(k5, k6, hidden2, num_classes)
    return {"w1": w1, "b1": b1, "w2": w2, "b2": b2, "w3": w3, "b3": b3}


def prepare_params(params, num_classes, *, lane=LANE, mxu_dtype=jnp.bfloat16):
    """Zero-pad hidden/output dims to lane multiples and cast MXU operands to
    bf16; biases stay f32. Zero padding + ReLU(0)=0 keeps padded lanes inert."""
    def pad_cols(a, n):
        return jnp.pad(a, ((0, 0), (0, n - a.shape[1])))

    def pad_rows(a, n):
        return jnp.pad(a, ((0, n - a.shape[0]), (0, 0)))

    w1, b1 = params["w1"], params["b1"]
    w2, b2 = params["w2"], params["b2"]
    w3, b3 = params["w3"], params["b3"]
    h1p = _round_up(w1.shape[1], lane)
    h2p = _round_up(w2.shape[1], lane)
    ncp = _round_up(w3.shape[1], lane)
    return {
        "w1": pad_cols(w1, h1p).astype(mxu_dtype),
        "b1": pad_cols(b1, h1p).astype(jnp.float32),
        "w2": pad_cols(pad_rows(w2, h1p), h2p).astype(mxu_dtype),
        "b2": pad_cols(b2, h2p).astype(jnp.float32),
        "w3": pad_cols(pad_rows(w3, h2p), ncp).astype(mxu_dtype),
        "b3": pad_cols(b3, ncp).astype(jnp.float32),
        "num_classes": num_classes,
    }


def _xla_forward(z, prepped):
    """Plain XLA path with the same bf16-operand / f32-accumulate numerics
    (f32 result, no final bf16 rounding). Used for tiny batches and as the
    tight correctness reference."""
    zb = z.astype(prepped["w1"].dtype)
    h = jnp.dot(zb, prepped["w1"], preferred_element_type=jnp.float32)
    h = jnp.maximum(h + prepped["b1"], 0.0)
    h = jnp.dot(h.astype(prepped["w2"].dtype), prepped["w2"],
                preferred_element_type=jnp.float32)
    h = jnp.maximum(h + prepped["b2"], 0.0)
    o = jnp.dot(h.astype(prepped["w3"].dtype), prepped["w3"],
                preferred_element_type=jnp.float32) + prepped["b3"]
    return o[:, :prepped["num_classes"]]


def classifier_forward(z, prepped, *, force_pallas=False, out_dtype=jnp.bfloat16):
    """z: (B, input_size) float32. prepped: lane-padded params from
    prepare_params. Returns (B, num_classes) logits in `out_dtype`."""
    B, in_size = z.shape
    num_classes = prepped["num_classes"]

    # Tiny batches: pallas launch + DMA overhead exceeds the whole compute.
    if not force_pallas and B < 64:
        return _xla_forward(z, prepped).astype(out_dtype)

    w1, b1 = prepped["w1"], prepped["b1"]
    w2, b2 = prepped["w2"], prepped["b2"]
    w3, b3 = prepped["w3"], prepped["b3"]
    h1 = w1.shape[1]
    h2 = w2.shape[1]
    nout = w3.shape[1]

    tm, b_pad, n_tiles = _choose_tiling(B)
    z_bf16 = z.astype(jnp.bfloat16)
    if b_pad != B:
        z_bf16 = jnp.pad(z_bf16, ((0, b_pad - B), (0, 0)))
    grid = (n_tiles,)

    flops = 2 * b_pad * (in_size * h1 + h1 * h2 + h2 * nout)
    bytes_accessed = int(
        b_pad * in_size * 2                      # z (bf16)
        + (w1.size + w2.size + w3.size) * 2      # weights (bf16)
        + (b1.size + b2.size + b3.size) * 4      # biases (f32)
        + b_pad * nout * 2                       # output (bf16)
    )

    out = pl.pallas_call(
        _mlp_kernel,
        out_shape=jax.ShapeDtypeStruct((b_pad, nout), out_dtype),
        grid_spec=pltpu.PrefetchScalarGridSpec(
            num_scalar_prefetch=0,
            grid=grid,
            in_specs=[
                pl.BlockSpec((tm, in_size), lambda i: (i, 0)),   # z tile (pipelined)
                pl.BlockSpec((in_size, h1), lambda i: (0, 0)),   # weights stay resident
                pl.BlockSpec((1, h1), lambda i: (0, 0)),
                pl.BlockSpec((h1, h2), lambda i: (0, 0)),
                pl.BlockSpec((1, h2), lambda i: (0, 0)),
                pl.BlockSpec((h2, nout), lambda i: (0, 0)),
                pl.BlockSpec((1, nout), lambda i: (0, 0)),
            ],
            out_specs=pl.BlockSpec((tm, nout), lambda i: (i, 0)),
        ),
        compiler_params=pltpu.CompilerParams(
            dimension_semantics=("parallel",)),
        cost_estimate=pl.CostEstimate(
            flops=flops, bytes_accessed=bytes_accessed, transcendentals=0),
    )(z_bf16, w1, b1, w2, b2, w3, b3)

    return out[:B, :num_classes]


def reference_forward_f32(z, params):
    h = jnp.maximum(z @ params["w1"] + params["b1"], 0.0)
    h = jnp.maximum(h @ params["w2"] + params["b2"], 0.0)
    return h @ params["w3"] + params["b3"]


if __name__ == "__main__":
    key = jax.random.PRNGKey(0)
    k_z, k_z2, k_p = jax.random.split(key, 3)

    feature_dim = 16
    context_enabled = True
    input_size = feature_dim * (2 if context_enabled else 1)  # 32
    hidden1, hidden2, num_classes = 64, 32, 10

    params = init_params(k_p, input_size, hidden1, hidden2, num_classes)
    prepped = prepare_params(params, num_classes)

    # --- small batch (module-sized), force the Pallas path so the kernel runs.
    B = 2
    z = jax.random.normal(k_z, (B, input_size), jnp.float32)
    out = classifier_forward(z, prepped, force_pallas=True)
    out = jax.block_until_ready(out)
    assert out.shape == (B, num_classes)
    out_f32 = out.astype(jnp.float32)
    ref_bf16 = _xla_forward(z, prepped)          # same bf16-operand numerics, f32 result
    ref_f32 = reference_forward_f32(z, params)   # pure-f32 PyTorch-equivalent math
    assert jnp.allclose(out_f32, ref_bf16, atol=2e-2, rtol=2e-2)
    assert jnp.allclose(out_f32, ref_f32, atol=1e-1, rtol=1e-1)

    # --- larger ragged batch: exercises adaptive tiling (B=600 -> 608 padded
    #     rows, 1 tile on v5e/v6e, 2 parallel tiles on v7x).
    B2 = 600
    z2 = jax.random.normal(k_z2, (B2, input_size), jnp.float32)
    out2 = classifier_forward(z2, prepped)
    out2 = jax.block_until_ready(out2)
    assert out2.shape == (B2, num_classes)
    ref2 = _xla_forward(z2, prepped)
    assert jnp.allclose(out2.astype(jnp.float32), ref2, atol=2e-2, rtol=2e-2)

    print("KERNEL_OK")
</pallas_src>

<mosaic_0001>
module attributes {stable_mosaic.version = 11 : i64} {
  func.func @_mlp_kernel(%arg0: i32, %arg1: memref<16x32xbf16, #tpu.memory_space<vmem>>, %arg2: memref<32x128xbf16, #tpu.memory_space<vmem>>, %arg3: memref<1x128xf32, #tpu.memory_space<vmem>>, %arg4: memref<128x128xbf16, #tpu.memory_space<vmem>>, %arg5: memref<1x128xf32, #tpu.memory_space<vmem>>, %arg6: memref<128x128xbf16, #tpu.memory_space<vmem>>, %arg7: memref<1x128xf32, #tpu.memory_space<vmem>>, %arg8: memref<16x128xbf16, #tpu.memory_space<vmem>>) attributes {dimension_semantics = [#tpu.dimension_semantics<parallel>], iteration_bounds = array<i64: 1>, scalar_prefetch = 0 : i64, scratch_operands = 0 : i64, tpu.core_type = #tpu.core_type<tc>, window_params = [{transform_indices = @transform_0, window_bounds = array<i64: 16, 32>}, {pipeline_mode = #tpu.pipeline_mode<synchronous>, transform_indices = @transform_1, window_bounds = array<i64: 32, 128>}, {pipeline_mode = #tpu.pipeline_mode<synchronous>, transform_indices = @transform_2, window_bounds = array<i64: 1, 128>}, {pipeline_mode = #tpu.pipeline_mode<synchronous>, transform_indices = @transform_3, window_bounds = array<i64: 128, 128>}, {pipeline_mode = #tpu.pipeline_mode<synchronous>, transform_indices = @transform_4, window_bounds = array<i64: 1, 128>}, {pipeline_mode = #tpu.pipeline_mode<synchronous>, transform_indices = @transform_5, window_bounds = array<i64: 128, 128>}, {pipeline_mode = #tpu.pipeline_mode<synchronous>, transform_indices = @transform_6, window_bounds = array<i64: 1, 128>}, {transform_indices = @transform_7, window_bounds = array<i64: 16, 128>}]} {
    %c0 = arith.constant 0 : index
    %c0_0 = arith.constant 0 : index
    %0 = vector.load %arg1[%c0, %c0_0] : memref<16x32xbf16, #tpu.memory_space<vmem>>, vector<16x32xbf16>
    %c0_1 = arith.constant 0 : index
    %c0_2 = arith.constant 0 : index
    %1 = vector.load %arg2[%c0_1, %c0_2] : memref<32x128xbf16, #tpu.memory_space<vmem>>, vector<32x128xbf16>
    %cst = arith.constant dense<0.000000e+00> : vector<16x128xf32>
    %2 = tpu.matmul %0, %1, %cst {dimension_numbers = #tpu.dot_dimension_numbers<[1], [0], [0], [1], [0, 0, 1, 1], [], []>} : vector<16x32xbf16>, vector<32x128xbf16>, vector<16x128xf32> -> vector<16x128xf32>
    %c0_3 = arith.constant 0 : index
    %c0_4 = arith.constant 0 : index
    %3 = vector.load %arg3[%c0_3, %c0_4] : memref<1x128xf32, #tpu.memory_space<vmem>>, vector<1x128xf32>
    %4 = vector.broadcast %3 : vector<1x128xf32> to vector<16x128xf32>
    %5 = arith.addf %2, %4 : vector<16x128xf32>
    %cst_5 = arith.constant 0.000000e+00 : f32
    %6 = vector.broadcast %cst_5 : f32 to vector<16x128xf32>
    %7 = arith.maximumf %5, %6 : vector<16x128xf32>
    %8 = arith.truncf %7 : vector<16x128xf32> to vector<16x128xbf16>
    %c0_6 = arith.constant 0 : index
    %c0_7 = arith.constant 0 : index
    %9 = vector.load %arg4[%c0_6, %c0_7] : memref<128x128xbf16, #tpu.memory_space<vmem>>, vector<128x128xbf16>
    %cst_8 = arith.constant dense<0.000000e+00> : vector<16x128xf32>
    %10 = tpu.matmul %8, %9, %cst_8 {dimension_numbers = #tpu.dot_dimension_numbers<[1], [0], [0], [1], [0, 0, 1, 1], [], []>} : vector<16x128xbf16>, vector<128x128xbf16>, vector<16x128xf32> -> vector<16x128xf32>
    %c0_9 = arith.constant 0 : index
    %c0_10 = arith.constant 0 : index
    %11 = vector.load %arg5[%c0_9, %c0_10] : memref<1x128xf32, #tpu.memory_space<vmem>>, vector<1x128xf32>
    %12 = vector.broadcast %11 : vector<1x128xf32> to vector<16x128xf32>
    %13 = arith.addf %10, %12 : vector<16x128xf32>
    %cst_11 = arith.constant 0.000000e+00 : f32
    %14 = vector.broadcast %cst_11 : f32 to vector<16x128xf32>
    %15 = arith.maximumf %13, %14 : vector<16x128xf32>
    %16 = arith.truncf %15 : vector<16x128xf32> to vector<16x128xbf16>
    %c0_12 = arith.constant 0 : index
    %c0_13 = arith.constant 0 : index
    %17 = vector.load %arg6[%c0_12, %c0_13] : memref<128x128xbf16, #tpu.memory_space<vmem>>, vector<128x128xbf16>
    %cst_14 = arith.constant dense<0.000000e+00> : vector<16x128xf32>
    %18 = tpu.matmul %16, %17, %cst_14 {dimension_numbers = #tpu.dot_dimension_numbers<[1], [0], [0], [1], [0, 0, 1, 1], [], []>} : vector<16x128xbf16>, vector<128x128xbf16>, vector<16x128xf32> -> vector<16x128xf32>
    %c0_15 = arith.constant 0 : index
    %c0_16 = arith.constant 0 : index
    %19 = vector.load %arg7[%c0_15, %c0_16] : memref<1x128xf32, #tpu.memory_space<vmem>>, vector<1x128xf32>
    %20 = vector.broadcast %19 : vector<1x128xf32> to vector<16x128xf32>
    %21 = arith.addf %18, %20 : vector<16x128xf32>
    %22 = arith.truncf %21 : vector<16x128xf32> to vector<16x128xbf16>
    %c0_17 = arith.constant 0 : index
    %c0_18 = arith.constant 0 : index
    %23 = vector.load %arg8[%c0_17, %c0_18] : memref<16x128xbf16, #tpu.memory_space<vmem>>, vector<16x128xbf16>
    tpu.vector_store %arg8[%c0_17, %c0_18], %22 {strides = array<i32>} : memref<16x128xbf16, #tpu.memory_space<vmem>>, vector<16x128xbf16>,
    return
  }
  func.func @transform_0(%arg0: i32) -> (i32, i32) {
    %c0_i32 = arith.constant 0 : i32
    %c0_i32_0 = arith.constant 0 : i32
    return %arg0, %c0_i32 : i32, i32
  }
  func.func @transform_1(%arg0: i32) -> (i32, i32) {
    %c0_i32 = arith.constant 0 : i32
    %c0_i32_0 = arith.constant 0 : i32
    %c0_i32_1 = arith.constant 0 : i32
    return %c0_i32, %c0_i32_0 : i32, i32
  }
  func.func @transform_2(%arg0: i32) -> (i32, i32) {
    %c0_i32 = arith.constant 0 : i32
    %c0_i32_0 = arith.constant 0 : i32
    %c0_i32_1 = arith.constant 0 : i32
    return %c0_i32, %c0_i32_0 : i32, i32
  }
  func.func @transform_3(%arg0: i32) -> (i32, i32) {
    %c0_i32 = arith.constant 0 : i32
    %c0_i32_0 = arith.constant 0 : i32
    %c0_i32_1 = arith.constant 0 : i32
    return %c0_i32, %c0_i32_0 : i32, i32
  }
  func.func @transform_4(%arg0: i32) -> (i32, i32) {
    %c0_i32 = arith.constant 0 : i32
    %c0_i32_0 = arith.constant 0 : i32
    %c0_i32_1 = arith.constant 0 : i32
    return %c0_i32, %c0_i32_0 : i32, i32
  }
  func.func @transform_5(%arg0: i32) -> (i32, i32) {
    %c0_i32 = arith.constant 0 : i32
    %c0_i32_0 = arith.constant 0 : i32
    %c0_i32_1 = arith.constant 0 : i32
    return %c0_i32, %c0_i32_0 : i32, i32
  }
  func.func @transform_6(%arg0: i32) -> (i32, i32) {
    %c0_i32 = arith.constant 0 : i32
    %c0_i32_0 = arith.constant 0 : i32
    %c0_i32_1 = arith.constant 0 : i32
    return %c0_i32, %c0_i32_0 : i32, i32
  }
  func.func @transform_7(%arg0: i32) -> (i32, i32) {
    %c0_i32 = arith.constant 0 : i32
    %c0_i32_0 = arith.constant 0 : i32
    return %arg0, %c0_i32 : i32, i32
  }
}

</mosaic_0001>

<llo_original>
// kernel: tpu_custom_call.1
$region0: #{tpu_custom_call.1}
  #allocation0 [shape = 'u32[]', space=smem, size = 0x4, offset = 0x4, fixed_abs, tag = 'smem constant byte address 0x4 - core index']
  #allocation1 [shape = 'u32[72,128]{1,0:T(1,128)}', space=vmem, size = 0x9000, scoped, tag = 'internal scratch']
  %s0 = inlined_call_operand.hbm [shape: bf16[16,32], index: 0, kind: input, shape index: {}]
  %s1 = inlined_call_operand.hbm [shape: bf16[32,128], index: 1, kind: input, shape index: {}]
  %s2 = inlined_call_operand.vmem [shape: f32[1,128], index: 2, kind: input, shape index: {}]
  %s3 = inlined_call_operand.hbm [shape: bf16[128,128], index: 3, kind: input, shape index: {}]
  %s4 = inlined_call_operand.vmem [shape: f32[1,128], index: 4, kind: input, shape index: {}]
  %s5 = inlined_call_operand.hbm [shape: bf16[128,128], index: 5, kind: input, shape index: {}]
  %s6 = inlined_call_operand.vmem [shape: f32[1,128], index: 6, kind: input, shape index: {}]
  %s7 = inlined_call_operand.hbm [shape: bf16[16,128], index: 7, kind: output, shape index: {}]
  %s8 = sld [smem:[#allocation0]]
  $region54: #{tpu_custom_call.1} parent=0
    _
  %s10 = ssub.s32 1, %s8
  %s11 = scalar_select 0, %s10, %s8
  $region1: #{tpu_custom_call.1} parent=0
    #allocation2 [shape = 'u8[4096]{0}', space=vmem, size = 0x1000, scoped, tag = 'input window, operand 0, single buffered']
    #allocation3 [shape = 's32[1]{0}', space=sflag, size = 0x4, scoped, tag = 'scoped memory for tpu_custom_call.1']
    #allocation4 [shape = 's32[1]{0}', space=sflag, size = 0x4, scoped, tag = 'scoped memory for tpu_custom_call.1']
    #allocation5 [shape = 'u8[8192]{0}', space=vmem, size = 0x2000, scoped, tag = 'input window, operand 1, single buffered']
    #allocation6 [shape = 's32[1]{0}', space=sflag, size = 0x4, scoped, tag = 'scoped memory for tpu_custom_call.1']
    #allocation7 [shape = 'u8[32768]{0}', space=vmem, size = 0x8000, scoped, tag = 'input window, operand 3, single buffered']
    #allocation8 [shape = 'u8[32768]{0}', space=vmem, size = 0x8000, scoped, tag = 'input window, operand 5, single buffered']
    #allocation9 [shape = 's32[1]{0}', space=sflag, size = 0x4, scoped, tag = 'scoped memory for tpu_custom_call.1']
    #allocation10 [shape = 'u8[4096]{0}', space=vmem, size = 0x1000, scoped, tag = 'output window, operand 0, single buffered']
    %12 = vsyncpa [#allocation3], 0
    %13 = vsyncpa [#allocation6], 0
    %14 = vsyncpa [#allocation9], 0
    %15 = vsyncpa [#allocation4], 0
    // Predicated region
    $region2: #{tpu_custom_call.1} parent=1 // pred_check
      _
    $region3: #{tpu_custom_call.1} parent=1 // pred_check_branch
      %17 = sbr.rel (0) target = $region5
    $region4: #{tpu_custom_call.1} parent=1 // pred_region
      %19 = vsyncadd [#allocation3], 0
      %s20 = sshll.u32 %s0, 4
      %s21 = int_to_ptr.hbm [resolvable:$true] %s20
      %s22 = sshll.u32 [#allocation2], 4
      %s23 = int_to_ptr.vmem [resolvable:$true] %s22
      %28 = dma.hbm_to_vmem [thread:$0]  %s21, 128, %s23, [#allocation3], 64, 64, 4
    $region5: #{tpu_custom_call.1} parent=1 // pred_fallthru
      _
    // Predicated region
    $region6: #{tpu_custom_call.1} parent=1 // pred_check
      _
    $region7: #{tpu_custom_call.1} parent=1 // pred_check_branch
      %30 = sbr.rel (0) target = $region9
    $region8: #{tpu_custom_call.1} parent=1 // pred_region
      %32 = vsyncadd [#allocation6], 0
      %s33 = sshll.u32 %s1, 4
      %s34 = int_to_ptr.hbm [resolvable:$true] %s33
      %s35 = sshll.u32 [#allocation5], 4
      %s36 = int_to_ptr.vmem [resolvable:$true] %s35
      %41 = dma.hbm_to_vmem [thread:$0]  %s34, 256, %s36, [#allocation6], 64, 64, 4
    $region9: #{tpu_custom_call.1} parent=1 // pred_fallthru
      _
    // Predicated region
    $region10: #{tpu_custom_call.1} parent=1 // pred_check
      _
    $region11: #{tpu_custom_call.1} parent=1 // pred_check_branch
      %43 = sbr.rel (0) target = $region13
    $region12: #{tpu_custom_call.1} parent=1 // pred_region
      _
    $region13: #{tpu_custom_call.1} parent=1 // pred_fallthru
      _
    // Predicated region
    $region14: #{tpu_custom_call.1} parent=1 // pred_check
      _
    $region15: #{tpu_custom_call.1} parent=1 // pred_check_branch
      %45 = sbr.rel (0) target = $region17
    $region16: #{tpu_custom_call.1} parent=1 // pred_region
      %47 = vsyncadd [#allocation6], 0
      %s48 = sshll.u32 %s3, 4
      %s49 = int_to_ptr.hbm [resolvable:$true] %s48
      %s50 = sshll.u32 [#allocation7], 4
      %s51 = int_to_ptr.vmem [resolvable:$true] %s50
      %56 = dma.hbm_to_vmem [thread:$0]  %s49, 1024, %s51, [#allocation6], 64, 64, 4
    $region17: #{tpu_custom_call.1} parent=1 // pred_fallthru
      _
    // Predicated region
    $region18: #{tpu_custom_call.1} parent=1 // pred_check
      _
    $region19: #{tpu_custom_call.1} parent=1 // pred_check_branch
      %58 = sbr.rel (0) target = $region21
    $region20: #{tpu_custom_call.1} parent=1 // pred_region
      _
    $region21: #{tpu_custom_call.1} parent=1 // pred_fallthru
      _
    // Predicated region
    $region22: #{tpu_custom_call.1} parent=1 // pred_check
      _
    $region23: #{tpu_custom_call.1} parent=1 // pred_check_branch
      %60 = sbr.rel (0) target = $region25
    $region24: #{tpu_custom_call.1} parent=1 // pred_region
      %62 = vsyncadd [#allocation9], 0
      %s63 = sshll.u32 %s5, 4
      %s64 = int_to_ptr.hbm [resolvable:$true] %s63
      %s65 = sshll.u32 [#allocation8], 4
      %s66 = int_to_ptr.vmem [resolvable:$true] %s65
      %71 = dma.hbm_to_vmem [thread:$0]  %s64, 1024, %s66, [#allocation9], 64, 64, 4
    $region25: #{tpu_custom_call.1} parent=1 // pred_fallthru
      _
    // Predicated region
    $region26: #{tpu_custom_call.1} parent=1 // pred_check
      _
    $region27: #{tpu_custom_call.1} parent=1 // pred_check_branch
      %73 = sbr.rel (0) target = $region29
    $region28: #{tpu_custom_call.1} parent=1 // pred_region
      _
    $region29: #{tpu_custom_call.1} parent=1 // pred_fallthru
      _
    // Predicated region
    $region30: #{tpu_custom_call.1} parent=1 // pred_check
      _
    $region31: #{tpu_custom_call.1} parent=1 // pred_check_branch
      %75 = sbr.rel (0) target = $region33
    $region32: #{tpu_custom_call.1} parent=1 // pred_region
      %77 = dma.done [#allocation3], 128
    $region33: #{tpu_custom_call.1} parent=1 // pred_fallthru
      _
    // Predicated region
    $region34: #{tpu_custom_call.1} parent=1 // pred_check
      _
    $region35: #{tpu_custom_call.1} parent=1 // pred_check_branch
      %79 = sbr.rel (0) target = $region37
    $region36: #{tpu_custom_call.1} parent=1 // pred_region
      %81 = dma.done [#allocation6], 256
    $region37: #{tpu_custom_call.1} parent=1 // pred_fallthru
      _
    // Predicated region
    $region38: #{tpu_custom_call.1} parent=1 // pred_check
      _
    $region39: #{tpu_custom_call.1} parent=1 // pred_check_branch
      %83 = sbr.rel (0) target = $region41
    $region40: #{tpu_custom_call.1} parent=1 // pred_region
      %85 = dma.done [#allocation6], 1024
    $region41: #{tpu_custom_call.1} parent=1 // pred_fallthru
      _
    // Predicated region
    $region42: #{tpu_custom_call.1} parent=1 // pred_check
      _
    $region43: #{tpu_custom_call.1} parent=1 // pred_check_branch
      %87 = sbr.rel (0) target = $region45
    $region44: #{tpu_custom_call.1} parent=1 // pred_region
      %89 = dma.done [#allocation9], 1024
    $region45: #{tpu_custom_call.1} parent=1 // pred_fallthru
      _
    %v91 = vld [vmem:[#allocation2] sm:$0xf]
    %v92 = vld [vmem:[#allocation2 + $0x4] sm:$0xf]
    %v93 = vld [vmem:[#allocation5] sm:$0xf]
    %v94 = vld [vmem:[#allocation5 + $0x4] sm:$0xf]
    %v95 = vld [vmem:[#allocation5 + $0x8] sm:$0xf]
    %v96 = vld [vmem:[#allocation5 + $0xc] sm:$0xf]
    %v97 = vld [vmem:[%s2] sm:$0x1]
    %v99 = vperm.slane %v97, 0
    %v103 = vunpack.c.l.b16 %v91
    %v104 = vunpack.c.l.b16 %v92
    %v105 = vpack.c.b16 %v104, %v103
    %v110 = vunpack.c.l.b16 %v93
    %v111 = vunpack.c.l.b16 %v94
    %v112 = vunpack.c.l.b16 %v95
    %v113 = vunpack.c.l.b16 %v96
    %v114 = vpack.c.b16 %v111, %v110
    %v115 = vpack.c.b16 %v113, %v112
    %vm118 = vcmask 261120
    %v120 = vsel %vm118, %v105, 0
    %122 = vmatpush.bf16.msra.mxu0 0
    %123 = vmatpush.bf16.msra.mxu0 0
    %124 = vmatpush.bf16.msra.mxu0 0
    %125 = vmatpush.bf16.msra.mxu0 0
    %126 = vmatpush.bf16.msra.mxu0 0
    %127 = vmatpush.bf16.msra.mxu0 0
    %128 = vmatpush.bf16.msra.mxu0 %v115
    %129 = vmatpush.bf16.msra.mxu0 %v114
    %130 = vmatmul.bf16.gmra.mxu0 %v120
    %v131 = vpop.f32.mrf.mxu0
    %v132 = vadd.f32 %v99, %v131
    %v133 = vpop.f32.mrf.mxu0
    %v134 = vadd.f32 %v99, %v133
    %135 = vdwg.mxu0
    %v136 = vmax.f32 %v132, 0.0
    %v137 = vmax.f32 %v134, 0.0
    %v138 = vpack.c.bf16 %v137, %v136
    %v139 = vld [vmem:[#allocation7] sm:$0xf]
    %v140 = vld [vmem:[#allocation7 + $0x4] sm:$0xf]
    %v141 = vld [vmem:[#allocation7 + $0x8] sm:$0xf]
    %v142 = vld [vmem:[#allocation7 + $0xc] sm:$0xf]
    %v143 = vld [vmem:[#allocation7 + $0x10] sm:$0xf]
    %v144 = vld [vmem:[#allocation7 + $0x14] sm:$0xf]
    %v145 = vld [vmem:[#allocation7 + $0x18] sm:$0xf]
    %v146 = vld [vmem:[#allocation7 + $0x1c] sm:$0xf]
    %v147 = vld [vmem:[#allocation7 + $0x20] sm:$0xf]
    %v148 = vld [vmem:[#allocation7 + $0x24] sm:$0xf]
    %v149 = vld [vmem:[#allocation7 + $0x28] sm:$0xf]
    %v150 = vld [vmem:[#allocation7 + $0x2c] sm:$0xf]
    %v151 = vld [vmem:[#allocation7 + $0x30] sm:$0xf]
    %v152 = vld [vmem:[#allocation7 + $0x34] sm:$0xf]
    %v153 = vld [vmem:[#allocation7 + $0x38] sm:$0xf]
    %v154 = vld [vmem:[#allocation7 + $0x3c] sm:$0xf]
    %v155 = vld [vmem:[%s4] sm:$0x1]
    %v157 = vperm.slane %v155, 0
    %v175 = vunpack.c.l.b16 %v139
    %v176 = vunpack.c.l.b16 %v140
    %v177 = vunpack.c.l.b16 %v141
    %v178 = vunpack.c.l.b16 %v142
    %v179 = vunpack.c.l.b16 %v143
    %v180 = vunpack.c.l.b16 %v144
    %v181 = vunpack.c.l.b16 %v145
    %v182 = vunpack.c.l.b16 %v146
    %v183 = vunpack.c.l.b16 %v147
    %v184 = vunpack.c.l.b16 %v148
    %v185 = vunpack.c.l.b16 %v149
    %v186 = vunpack.c.l.b16 %v150
    %v187 = vunpack.c.l.b16 %v151
    %v188 = vunpack.c.l.b16 %v152
    %v189 = vunpack.c.l.b16 %v153
    %v190 = vunpack.c.l.b16 %v154
    %v191 = vpack.c.b16 %v176, %v175
    %v192 = vpack.c.b16 %v178, %v177
    %v193 = vpack.c.b16 %v180, %v179
    %v194 = vpack.c.b16 %v182, %v181
    %v195 = vpack.c.b16 %v184, %v183
    %v196 = vpack.c.b16 %v186, %v185
    %v197 = vpack.c.b16 %v188, %v187
    %v198 = vpack.c.b16 %v190, %v189
    %207 = vmatpush.bf16.msra.mxu0 %v198
    %208 = vmatpush.bf16.msra.mxu0 %v197
    %209 = vmatpush.bf16.msra.mxu0 %v196
    %210 = vmatpush.bf16.msra.mxu0 %v195
    %211 = vmatpush.bf16.msra.mxu0 %v194
    %212 = vmatpush.bf16.msra.mxu0 %v193
    %213 = vmatpush.bf16.msra.mxu0 %v192
    %214 = vmatpush.bf16.msra.mxu0 %v191
    %215 = vmatmul.bf16.gmra.mxu0 %v138
    %v216 = vpop.f32.mrf.mxu0
    %v217 = vadd.f32 %v157, %v216
    %v218 = vpop.f32.mrf.mxu0
    %v219 = vadd.f32 %v157, %v218
    %220 = vdwg.mxu0
    %v221 = vmax.f32 %v217, 0.0
    %v222 = vmax.f32 %v219, 0.0
    %v223 = vpack.c.bf16 %v222, %v221
    %v224 = vld [vmem:[#allocation8] sm:$0xf]
    %v225 = vld [vmem:[#allocation8 + $0x4] sm:$0xf]
    %v226 = vld [vmem:[#allocation8 + $0x8] sm:$0xf]
    %v227 = vld [vmem:[#allocation8 + $0xc] sm:$0xf]
    %v228 = vld [vmem:[#allocation8 + $0x10] sm:$0xf]
    %v229 = vld [vmem:[#allocation8 + $0x14] sm:$0xf]
    %v230 = vld [vmem:[#allocation8 + $0x18] sm:$0xf]
    %v231 = vld [vmem:[#allocation8 + $0x1c] sm:$0xf]
    %v232 = vld [vmem:[#allocation8 + $0x20] sm:$0xf]
    %v233 = vld [vmem:[#allocation8 + $0x24] sm:$0xf]
    %v234 = vld [vmem:[#allocation8 + $0x28] sm:$0xf]
    %v235 = vld [vmem:[#allocation8 + $0x2c] sm:$0xf]
    %v236 = vld [vmem:[#allocation8 + $0x30] sm:$0xf]
    %v237 = vld [vmem:[#allocation8 + $0x34] sm:$0xf]
    %v238 = vld [vmem:[#allocation8 + $0x38] sm:$0xf]
    %v239 = vld [vmem:[#allocation8 + $0x3c] sm:$0xf]
    %v240 = vld [vmem:[%s6] sm:$0x1]
    %v242 = vperm.slane %v240, 0
    %v260 = vunpack.c.l.b16 %v224
    %v261 = vunpack.c.l.b16 %v225
    %v262 = vunpack.c.l.b16 %v226
    %v263 = vunpack.c.l.b16 %v227
    %v264 = vunpack.c.l.b16 %v228
    %v265 = vunpack.c.l.b16 %v229
    %v266 = vunpack.c.l.b16 %v230
    %v267 = vunpack.c.l.b16 %v231
    %v268 = vunpack.c.l.b16 %v232
    %v269 = vunpack.c.l.b16 %v233
    %v270 = vunpack.c.l.b16 %v234
    %v271 = vunpack.c.l.b16 %v235
    %v272 = vunpack.c.l.b16 %v236
    %v273 = vunpack.c.l.b16 %v237
    %v274 = vunpack.c.l.b16 %v238
    %v275 = vunpack.c.l.b16 %v239
    %v276 = vpack.c.b16 %v261, %v260
    %v277 = vpack.c.b16 %v263, %v262
    %v278 = vpack.c.b16 %v265, %v264
    %v279 = vpack.c.b16 %v267, %v266
    %v280 = vpack.c.b16 %v269, %v268
    %v281 = vpack.c.b16 %v271, %v270
    %v282 = vpack.c.b16 %v273, %v272
    %v283 = vpack.c.b16 %v275, %v274
    %292 = vmatpush.bf16.msra.mxu0 %v283
    %293 = vmatpush.bf16.msra.mxu0 %v282
    %294 = vmatpush.bf16.msra.mxu0 %v281
    %295 = vmatpush.bf16.msra.mxu0 %v280
    %296 = vmatpush.bf16.msra.mxu0 %v279
    %297 = vmatpush.bf16.msra.mxu0 %v278
    %298 = vmatpush.bf16.msra.mxu0 %v277
    %299 = vmatpush.bf16.msra.mxu0 %v276
    %300 = vmatmul.bf16.gmra.mxu0 %v223
    %v301 = vpop.f32.mrf.mxu0
    %v302 = vadd.f32 %v242, %v301
    %v303 = vpop.f32.mrf.mxu0
    %v304 = vadd.f32 %v242, %v303
    %305 = vdwg.mxu0
    %v306 = vpack.c.bf16 %v302, %v302
    %v307 = vpack.c.bf16 %v304, %v304
    %308 = vst [vmem:[#allocation10] sm:$0xf] %v306
    %309 = vst [vmem:[#allocation10 + $0x4] sm:$0xf] %v307
    // Predicated region
    $region46: #{tpu_custom_call.1} parent=1 // pred_check
      _
    $region47: #{tpu_custom_call.1} parent=1 // pred_check_branch
      %311 = sbr.rel (0) target = $region49
    $region48: #{tpu_custom_call.1} parent=1 // pred_region
      %313 = vsyncadd [#allocation4], 0
      %s314 = sshll.u32 [#allocation10], 4
      %s315 = int_to_ptr.vmem [resolvable:$true] %s314
      %s316 = sshll.u32 %s7, 4
      %s317 = int_to_ptr.hbm [resolvable:$true] %s316
      %322 = dma.vmem_to_hbm [thread:$0]  %s315, 128, %s317, [#allocation4], 64, 64, 4
    $region49: #{tpu_custom_call.1} parent=1 // pred_fallthru
      _
    // Predicated region
    $region50: #{tpu_custom_call.1} parent=1 // pred_check
      _
    $region51: #{tpu_custom_call.1} parent=1 // pred_check_branch
      %324 = sbr.rel (0) target = $region53
    $region52: #{tpu_custom_call.1} parent=1 // pred_region
      %326 = dma.done [#allocation4], 128
    $region53: #{tpu_custom_call.1} parent=1 // pred_fallthru
      _
    %327 = vsyncpa [#allocation3], 1
    %328 = vsyncpa [#allocation6], 1
    %329 = vsyncpa [#allocation9], 1
    %330 = vsyncpa [#allocation4], 1

</llo_original>
